<compile_context>
chip_gen: v7x
topology: tpu7x:2x2x1
jax: 0.10.0
libtpu: 0.0.40
codegen_flags: <defaults>
</compile_context>

<pallas_src>
import functools

import jax
import jax.numpy as jnp
from jax import lax
from jax.experimental import pallas as pl
from jax.experimental.pallas import tpu as pltpu


def _round_up(x: int, m: int) -> int:
    return (x + m - 1) // m * m


# ----------------------------------------------------------------------------
# Fast path: weight resident in VMEM, gather = one-hot MXU matmul.
# ----------------------------------------------------------------------------
def _onehot_embed_kernel(ids_ref,    # VMEM (tile, 1) int32 local ids, -1 == out-of-partition
                         w_ref,      # VMEM (V_part, D) weight (resident, constant block index)
                         o_ref,      # VMEM (tile, D) output
                         *, vpart: int):
    ids = ids_ref[...]                                            # (tile, 1)
    col = lax.broadcasted_iota(jnp.int32, (ids.shape[0], vpart), 1)
    onehot = (ids == col).astype(w_ref.dtype)                     # masked rows -> all zero
    o_ref[...] = jnp.dot(onehot, w_ref[...],
                         preferred_element_type=jnp.float32).astype(o_ref.dtype)


def _embed_onehot(local, weight, *, tile: int, t_pad: int):
    vpart, d = weight.shape
    ids_col = local.reshape(t_pad, 1)
    kernel = functools.partial(_onehot_embed_kernel, vpart=vpart)
    return pl.pallas_call(
        kernel,
        out_shape=jax.ShapeDtypeStruct((t_pad, d), weight.dtype),
        grid_spec=pltpu.PrefetchScalarGridSpec(
            num_scalar_prefetch=0,
            grid=(t_pad // tile,),
            in_specs=[
                pl.BlockSpec((tile, 1), lambda i: (i, 0)),        # local ids
                pl.BlockSpec((vpart, d), lambda i: (0, 0)),       # whole weight, re-fetch skipped
            ],
            out_specs=pl.BlockSpec((tile, d), lambda i: (i, 0)),
        ),
        compiler_params=pltpu.CompilerParams(
            dimension_semantics=("parallel",)),
    )(ids_col, weight)


# ----------------------------------------------------------------------------
# General path: weight stays in HBM, mask-gated per-row gather DMAs.
# ----------------------------------------------------------------------------
def _gather_embed_kernel(local_ref,   # SMEM (T_pad,) int32 local ids (scalar prefetch), -1 == masked
                         w_hbm,       # HBM  (V_part, D) weight (no auto-DMA)
                         o_ref,       # VMEM (tile, D) output
                         sems,        # (tile,) DMA completion semaphores
                         *, token_tile: int):
    base = pl.multiple_of(pl.program_id(0) * token_tile, token_tile)

    # Masked / padding tokens must come out as exact zeros. One pure zero-store
    # pass (no read-modify-write); valid-row DMAs overwrite their rows.
    o_ref[...] = jnp.zeros_like(o_ref)

    # Issue one row gather per in-partition token; masked rows issue nothing.
    def issue(t, carry):
        row = local_ref[base + t]

        @pl.when(row >= 0)
        def _():
            pltpu.make_async_copy(w_hbm.at[pl.ds(row, 1)],
                                  o_ref.at[pl.ds(t, 1)],
                                  sems.at[t]).start()

        return carry

    lax.fori_loop(0, token_tile, issue, 0, unroll=8)

    # Wait only for the DMAs that were actually issued, with the true descriptor.
    def wait(t, carry):
        row = local_ref[base + t]

        @pl.when(row >= 0)
        def _():
            pltpu.make_async_copy(w_hbm.at[pl.ds(row, 1)],
                                  o_ref.at[pl.ds(t, 1)],
                                  sems.at[t]).wait()

        return carry

    lax.fori_loop(0, token_tile, wait, 0, unroll=8)


def _embed_hbm_gather(local, weight, *, tile: int, t_pad: int):
    vpart, d = weight.shape
    kernel = functools.partial(_gather_embed_kernel, token_tile=tile)
    return pl.pallas_call(
        kernel,
        out_shape=jax.ShapeDtypeStruct((t_pad, d), weight.dtype),
        grid_spec=pltpu.PrefetchScalarGridSpec(
            num_scalar_prefetch=1,                                 # local ids -> SMEM
            grid=(t_pad // tile,),
            in_specs=[pl.BlockSpec(memory_space=pl.ANY)],          # weight stays in HBM
            out_specs=pl.BlockSpec((tile, d), lambda i, local: (i, 0)),
            scratch_shapes=[pltpu.SemaphoreType.DMA((tile,))],
        ),
        compiler_params=pltpu.CompilerParams(
            dimension_semantics=("parallel",)),
    )(local, weight)


# ----------------------------------------------------------------------------
# Wrapper (steps 1-2 of the module + path selection + tiling / padding).
# ----------------------------------------------------------------------------
def vocab_parallel_embedding(x, weight, *, vocab_start: int, token_tile: int = 128,
                             vmem_weight_budget: int = 8 * 1024 * 1024):
    """x: (B, S) int token ids; weight: (V_part, D). Returns (B, S, D)."""
    b, s = x.shape
    vpart, d = weight.shape
    t = b * s
    itemsize = jnp.dtype(weight.dtype).itemsize

    # Steps 1-2: partition mask + local ids. Out-of-partition AND padding
    # tokens are encoded as -1 so both kernels produce exact-zero rows for them.
    ids = x.reshape(t).astype(jnp.int32)
    mask = (ids >= vocab_start) & (ids < vocab_start + vpart)
    local = jnp.where(mask, ids - vocab_start, -1).astype(jnp.int32)

    # Token tile: sublane-aligned, lane-dense output block; capped so the
    # double-buffered (tile, D) output block stays well inside scoped VMEM
    # (v7x only has 64 MiB physical / 32 MiB default scoped).
    tile = max(8, min(token_tile, _round_up(t, 8)))
    while tile > 8 and 2 * tile * d * itemsize > 8 * 1024 * 1024:
        tile //= 2
    tile = max(8, _round_up(tile, 8))
    t_pad = _round_up(t, tile)
    if t_pad != t:
        local = jnp.pad(local, (0, t_pad - t), constant_values=-1)

    # Small-table fast path: whole weight fits a conservative VMEM budget
    # (safe on v5e/v6e/v7x) -> one-hot MXU gather, no per-row HBM DMAs.
    weight_bytes = vpart * d * itemsize
    if weight_bytes <= vmem_weight_budget and vpart <= 4096:
        out = _embed_onehot(local, weight, tile=tile, t_pad=t_pad)
    else:
        out = _embed_hbm_gather(local, weight, tile=tile, t_pad=t_pad)

    return out[:t].reshape(b, s, d)


def vocab_parallel_embedding_ref(x, weight, *, vocab_start: int):
    vpart = weight.shape[0]
    mask = (x >= vocab_start) & (x < vocab_start + vpart)
    local = jnp.where(mask, x - vocab_start, 0)
    y = jnp.take(weight, local, axis=0)
    return y * mask[..., None].astype(weight.dtype)


if __name__ == "__main__":
    # Module configuration (synthetic, deterministic): matches the nano-vllm
    # test -- num_embed=256, embed_dim=128, tp_size=2, tp_rank=1.
    num_embed = 256
    embed_dim = 128
    tp_size = 2
    tp_rank = 1
    num_embed_per_partition = num_embed // tp_size        # 128
    vocab_start_idx = num_embed_per_partition * tp_rank   # 128

    batch, seq = 2, 8

    key = jax.random.PRNGKey(0)
    kw, kx = jax.random.split(key)
    weight = jax.random.normal(kw, (num_embed_per_partition, embed_dim),
                               dtype=jnp.float32)
    # Token ids span the FULL vocab so some land outside this partition.
    x = jax.random.randint(kx, (batch, seq), 0, num_embed, dtype=jnp.int32)

    y_ref = vocab_parallel_embedding_ref(x, weight, vocab_start=vocab_start_idx)

    # 1) Fast path (weight resident in VMEM, one-hot MXU gather) -- the path
    #    the test config actually takes.
    y_fast = vocab_parallel_embedding(x, weight, vocab_start=vocab_start_idx)
    y_fast = jax.block_until_ready(y_fast)
    assert y_fast.shape == (batch, seq, embed_dim)
    assert jnp.allclose(y_fast, y_ref, atol=1e-5, rtol=1e-5)

    # 2) General path (weight in HBM, mask-gated per-row gather DMAs), forced
    #    by a zero VMEM budget, to verify it also compiles and matches.
    y_hbm = vocab_parallel_embedding(x, weight, vocab_start=vocab_start_idx,
                                     vmem_weight_budget=0)
    y_hbm = jax.block_until_ready(y_hbm)
    assert jnp.allclose(y_hbm, y_ref, atol=1e-5, rtol=1e-5)

    print("KERNEL_OK")
</pallas_src>

<mosaic_0001>
module attributes {stable_mosaic.version = 11 : i64} {
  func.func @_onehot_embed_kernel(%arg0: i32, %arg1: memref<16x1xi32, #tpu.memory_space<vmem>>, %arg2: memref<128x128xf32, #tpu.memory_space<vmem>>, %arg3: memref<16x128xf32, #tpu.memory_space<vmem>>) attributes {dimension_semantics = [#tpu.dimension_semantics<parallel>], iteration_bounds = array<i64: 1>, scalar_prefetch = 0 : i64, scratch_operands = 0 : i64, tpu.core_type = #tpu.core_type<tc>, window_params = [{transform_indices = @transform_0, window_bounds = array<i64: 16, 1>}, {pipeline_mode = #tpu.pipeline_mode<synchronous>, transform_indices = @transform_1, window_bounds = array<i64: 128, 128>}, {transform_indices = @transform_2, window_bounds = array<i64: 16, 128>}]} {
    %c0 = arith.constant 0 : index
    %c0_0 = arith.constant 0 : index
    %0 = vector.load %arg1[%c0, %c0_0] : memref<16x1xi32, #tpu.memory_space<vmem>>, vector<16x1xi32>
    %1 = tpu.iota {dimensions = array<i32: 1>} : vector<16x128xi32>
    %2 = vector.broadcast %0 : vector<16x1xi32> to vector<16x128xi32>
    %3 = arith.cmpi eq, %2, %1 : vector<16x128xi32>
    %4 = arith.extui %3 : vector<16x128xi1> to vector<16x128xi32>
    %5 = arith.sitofp %4 : vector<16x128xi32> to vector<16x128xf32>
    %c0_1 = arith.constant 0 : index
    %c0_2 = arith.constant 0 : index
    %6 = vector.load %arg2[%c0_1, %c0_2] : memref<128x128xf32, #tpu.memory_space<vmem>>, vector<128x128xf32>
    %cst = arith.constant dense<0.000000e+00> : vector<16x128xf32>
    %7 = tpu.matmul %5, %6, %cst {dimension_numbers = #tpu.dot_dimension_numbers<[1], [0], [0], [1], [0, 0, 1, 1], [], []>} : vector<16x128xf32>, vector<128x128xf32>, vector<16x128xf32> -> vector<16x128xf32>
    %c0_3 = arith.constant 0 : index
    %c0_4 = arith.constant 0 : index
    %8 = vector.load %arg3[%c0_3, %c0_4] : memref<16x128xf32, #tpu.memory_space<vmem>>, vector<16x128xf32>
    tpu.vector_store %arg3[%c0_3, %c0_4], %7 {strides = array<i32>} : memref<16x128xf32, #tpu.memory_space<vmem>>, vector<16x128xf32>,
    return
  }
  func.func @transform_0(%arg0: i32) -> (i32, i32) {
    %c0_i32 = arith.constant 0 : i32
    %c0_i32_0 = arith.constant 0 : i32
    return %arg0, %c0_i32 : i32, i32
  }
  func.func @transform_1(%arg0: i32) -> (i32, i32) {
    %c0_i32 = arith.constant 0 : i32
    %c0_i32_0 = arith.constant 0 : i32
    %c0_i32_1 = arith.constant 0 : i32
    return %c0_i32, %c0_i32_0 : i32, i32
  }
  func.func @transform_2(%arg0: i32) -> (i32, i32) {
    %c0_i32 = arith.constant 0 : i32
    %c0_i32_0 = arith.constant 0 : i32
    return %arg0, %c0_i32 : i32, i32
  }
}

</mosaic_0001>

<llo_original>
// kernel: tpu_custom_call.1
$region0: #{tpu_custom_call.1}
  #allocation0 [shape = 'u32[]', space=smem, size = 0x4, offset = 0x4, fixed_abs, tag = 'smem constant byte address 0x4 - core index']
  #allocation1 [shape = 'u32[144,128]{1,0:T(1,128)}', space=vmem, size = 0x12000, scoped, tag = 'internal scratch']
  %s0 = inlined_call_operand.vmem [shape: s32[16,1], index: 0, kind: input, shape index: {}]
  %s1 = inlined_call_operand.hbm [shape: f32[128,128], index: 1, kind: input, shape index: {}]
  %s2 = inlined_call_operand.hbm [shape: f32[16,128], index: 2, kind: output, shape index: {}]
  %s3 = sld [smem:[#allocation0]]
  $region22: #{tpu_custom_call.1} parent=0
    _
  %s5 = ssub.s32 1, %s3
  %s6 = scalar_select 0, %s5, %s3
  $region1: #{tpu_custom_call.1} parent=0
    #allocation2 [shape = 'u8[65536]{0}', space=vmem, size = 0x10000, scoped, tag = 'input window, operand 1, single buffered']
    #allocation3 [shape = 's32[1]{0}', space=sflag, size = 0x4, scoped, tag = 'scoped memory for tpu_custom_call.1']
    #allocation4 [shape = 's32[1]{0}', space=sflag, size = 0x4, scoped, tag = 'scoped memory for tpu_custom_call.1']
    #allocation5 [shape = 'u8[8192]{0}', space=vmem, size = 0x2000, scoped, tag = 'output window, operand 0, single buffered']
    %7 = vsyncpa [#allocation3], 0
    %8 = vsyncpa [#allocation4], 0
    // Predicated region
    $region2: #{tpu_custom_call.1} parent=1 // pred_check
      _
    $region3: #{tpu_custom_call.1} parent=1 // pred_check_branch
      %10 = sbr.rel (0) target = $region5
    $region4: #{tpu_custom_call.1} parent=1 // pred_region
      _
    $region5: #{tpu_custom_call.1} parent=1 // pred_fallthru
      _
    // Predicated region
    $region6: #{tpu_custom_call.1} parent=1 // pred_check
      _
    $region7: #{tpu_custom_call.1} parent=1 // pred_check_branch
      %12 = sbr.rel (0) target = $region9
    $region8: #{tpu_custom_call.1} parent=1 // pred_region
      %s14 = ssub.s32 2048, 2048
      %15 = vsyncadd [#allocation3], %s14
      %s16 = sshll.u32 [#allocation2], 4
      %s17 = int_to_ptr.vmem [resolvable:$true] %s16
      %22 = dma.hbm_to_vmem [thread:$0]  %s1, 2048, %s17, [#allocation3], 128, 128, 8
    $region9: #{tpu_custom_call.1} parent=1 // pred_fallthru
      _
    // Predicated region
    $region10: #{tpu_custom_call.1} parent=1 // pred_check
      _
    $region11: #{tpu_custom_call.1} parent=1 // pred_check_branch
      %24 = sbr.rel (0) target = $region13
    $region12: #{tpu_custom_call.1} parent=1 // pred_region
      %25 = dma.done [#allocation3], 2048
    $region13: #{tpu_custom_call.1} parent=1 // pred_fallthru
      _
    %v26 = vld [vmem:[%s0] sm:$0xff]
    %v27 = vld [vmem:[%s0 + $0x8] sm:$0xff]
    %v28 = vlaneseq
    %v29 = vand.u32 %v28, 127
    %30 = vset.pattern.permute.xlu0 0
    %31 = vperm.xlu0 %30, %v26
    %v32 = vpop.permute.xlu0 %31
    %33 = vset.pattern.permute.xlu0 0
    %34 = vperm.xlu0 %33, %v27
    %v35 = vpop.permute.xlu0 %34
    %vm36 = vcmp.eq.s32.totalorder %v32, %v29
    %vm37 = vcmp.eq.s32.totalorder %v35, %v29
    %v38 = vsel %vm36, 1, 0
    %v39 = vsel %vm37, 1, 0
    %v40 = vcvt.s32.f32 %v38
    %v41 = vcvt.s32.f32 %v39
    %v42 = vld [vmem:[#allocation2] sm:$0xff]
    %v43 = vld [vmem:[#allocation2 + $0x8] sm:$0xff]
    %v44 = vld [vmem:[#allocation2 + $0x10] sm:$0xff]
    %v45 = vld [vmem:[#allocation2 + $0x18] sm:$0xff]
    %v46 = vld [vmem:[#allocation2 + $0x20] sm:$0xff]
    %v47 = vld [vmem:[#allocation2 + $0x28] sm:$0xff]
    %v48 = vld [vmem:[#allocation2 + $0x30] sm:$0xff]
    %v49 = vld [vmem:[#allocation2 + $0x38] sm:$0xff]
    %v50 = vld [vmem:[#allocation2 + $0x40] sm:$0xff]
    %v51 = vld [vmem:[#allocation2 + $0x48] sm:$0xff]
    %v52 = vld [vmem:[#allocation2 + $0x50] sm:$0xff]
    %v53 = vld [vmem:[#allocation2 + $0x58] sm:$0xff]
    %v54 = vld [vmem:[#allocation2 + $0x60] sm:$0xff]
    %v55 = vld [vmem:[#allocation2 + $0x68] sm:$0xff]
    %v56 = vld [vmem:[#allocation2 + $0x70] sm:$0xff]
    %v57 = vld [vmem:[#allocation2 + $0x78] sm:$0xff]
    %58 = vmatprep.subr.mxu0 0.0
    %59 = vmatpush1.msra.mxu0 %v42
    %60 = vmatprep.subr.mxu0 0.0
    %61 = vmatpush1.msra.mxu0 %v43
    %62 = vmatprep.subr.mxu0 0.0
    %63 = vmatpush1.msra.mxu0 %v44
    %64 = vmatprep.subr.mxu0 0.0
    %65 = vmatpush1.msra.mxu0 %v45
    %66 = vmatprep.subr.mxu0 0.0
    %67 = vmatpush1.msra.mxu0 %v46
    %68 = vmatprep.subr.mxu0 0.0
    %69 = vmatpush1.msra.mxu0 %v47
    %70 = vmatprep.subr.mxu0 0.0
    %71 = vmatpush1.msra.mxu0 %v48
    %72 = vmatprep.subr.mxu0 0.0
    %73 = vmatpush1.msra.mxu0 %v49
    %74 = vmatprep.subr.mxu0 0.0
    %75 = vmatpush1.msra.mxu0 %v50
    %76 = vmatprep.subr.mxu0 0.0
    %77 = vmatpush1.msra.mxu0 %v51
    %78 = vmatprep.subr.mxu0 0.0
    %79 = vmatpush1.msra.mxu0 %v52
    %80 = vmatprep.subr.mxu0 0.0
    %81 = vmatpush1.msra.mxu0 %v53
    %82 = vmatprep.subr.mxu0 0.0
    %83 = vmatpush1.msra.mxu0 %v54
    %84 = vmatprep.subr.mxu0 0.0
    %85 = vmatpush1.msra.mxu0 %v55
    %86 = vmatprep.subr.mxu0 0.0
    %87 = vmatpush1.msra.mxu0 %v56
    %88 = vmatprep.subr.mxu0 0.0
    %89 = vmatpush1.msra.mxu0 %v57
    %90 = vmatprep.subr.mxu0 0.0
    %91 = vmatpush1.msra.mxu0 0.0
    %92 = vmatprep.subr.mxu0 0.0
    %93 = vmatpush1.msra.mxu0 0.0
    %94 = vmatprep.subr.mxu0 0.0
    %95 = vmatpush1.msra.mxu0 0.0
    %96 = vmatprep.subr.mxu0 0.0
    %97 = vmatpush1.msra.mxu0 0.0
    %98 = vmatprep.subr.mxu0 0.0
    %99 = vmatpush1.msra.mxu0 0.0
    %100 = vmatprep.subr.mxu0 0.0
    %101 = vmatpush1.msra.mxu0 0.0
    %102 = vmatprep.subr.mxu0 0.0
    %103 = vmatpush1.msra.mxu0 0.0
    %104 = vmatprep.subr.mxu0 0.0
    %105 = vmatpush1.msra.mxu0 0.0
    %106 = vmatprep.subr.mxu0 0.0
    %107 = vmatpush1.msra.mxu0 0.0
    %108 = vmatprep.subr.mxu0 0.0
    %109 = vmatpush1.msra.mxu0 0.0
    %110 = vmatprep.subr.mxu0 0.0
    %111 = vmatpush1.msra.mxu0 0.0
    %112 = vmatprep.subr.mxu0 0.0
    %113 = vmatpush1.msra.mxu0 0.0
    %114 = vmatprep.subr.mxu0 0.0
    %115 = vmatpush1.msra.mxu0 0.0
    %116 = vmatprep.subr.mxu0 0.0
    %117 = vmatpush1.msra.mxu0 0.0
    %118 = vmatprep.subr.mxu0 0.0
    %119 = vmatpush1.msra.mxu0 0.0
    %120 = vmatprep.subr.mxu0 0.0
    %121 = vmatpush1.msra.mxu0 0.0
    %122 = vmatprep.mubr.f32.mxu0 0.0
    %123 = vmatmul.mubr.f32.gmra.mrb[0].mxu0 %v40
    %v124 = vpop.f32.mrb[0].mxu0
    %v125 = vadd.f32 0.0, %v124
    %v126 = vpop.f32.mrb[0].mxu0
    %127 = vmatprep.mubr.f32.mxu0 0.0
    %128 = vmatmul.mubr.f32.gmra.mrb[0].mxu0 %v41
    %v129 = vpop.f32.mrb[0].mxu0
    %v130 = vadd.f32 0.0, %v129
    %v131 = vpop.f32.mrb[0].mxu0
    %132 = vdwg.mxu0
    %133 = vst [vmem:[#allocation5] sm:$0xff] %v125
    %134 = vst [vmem:[#allocation5 + $0x8] sm:$0xff] %v130
    // Predicated region
    $region14: #{tpu_custom_call.1} parent=1 // pred_check
      _
    $region15: #{tpu_custom_call.1} parent=1 // pred_check_branch
      %136 = sbr.rel (0) target = $region17
    $region16: #{tpu_custom_call.1} parent=1 // pred_region
      %s138 = ssub.s32 256, 256
      %139 = vsyncadd [#allocation4], %s138
      %s140 = sshll.u32 [#allocation5], 4
      %s141 = int_to_ptr.vmem [resolvable:$true] %s140
      %146 = dma.vmem_to_hbm [thread:$0]  %s141, 256, %s2, [#allocation4], 128, 128, 8
    $region17: #{tpu_custom_call.1} parent=1 // pred_fallthru
      _
    // Predicated region
    $region18: #{tpu_custom_call.1} parent=1 // pred_check
      _
    $region19: #{tpu_custom_call.1} parent=1 // pred_check_branch
      %148 = sbr.rel (0) target = $region21
    $region20: #{tpu_custom_call.1} parent=1 // pred_region
      %149 = dma.done [#allocation4], 256
    $region21: #{tpu_custom_call.1} parent=1 // pred_fallthru
      _
    %150 = vsyncpa [#allocation3], 1
    %151 = vsyncpa [#allocation4], 1

</llo_original>
